<compile_context>
chip_gen: v6e
topology: v6e:2x2x1
jax: 0.10.0
libtpu: 0.0.40
codegen_flags: <defaults>
</compile_context>

<pallas_src>
import functools

import jax
import jax.numpy as jnp
from jax import lax
from jax.experimental import pallas as pl
from jax.experimental.pallas import tpu as pltpu


def _deconv_leakyrelu_kernel(x_ref, w_ref, o_ref, xpad_ref, patches_ref, *,
                             Cin, Cpad, W, HW, NB, PAD, bias_row,
                             negative_slope):
    # x_ref:       (NB, Cin, HW)           unpadded NCHW input, H*W flat on lanes
    # w_ref:       (Cout, K)               K = 9*Cpad (+8); bias in column bias_row
    # o_ref:       (NB, Cout, HW)          LeakyReLU(conv_transpose) output
    # xpad_ref:    (NB, Cin, 2*PAD + HW)   zero-padded staging of the input (VMEM)
    # patches_ref: (K, NB*HW)              im2col staging for the single matmul

    # --- in-kernel zero padding (replaces wrapper jnp.pad + crop round-trips) --
    xpad_ref[...] = jnp.zeros_like(xpad_ref)
    xpad_ref[:, :, PAD:PAD + HW] = x_ref[...]            # lane-aligned store

    # --- im2col staging scratch ------------------------------------------------
    # Zero-init so the Cin->Cpad padding rows contribute exactly 0 to the
    # matmul; set the bias row to 1 (bias folded into the matmul).
    row_ids = lax.broadcasted_iota(jnp.int32, patches_ref.shape, 0)
    patches_ref[...] = (row_ids == bias_row).astype(patches_ref.dtype)

    # Column-boundary masks (row boundaries are handled by the zero padding of
    # xpad); hoisted/broadcast once, not per tap.
    col = lax.broadcasted_iota(jnp.int32, (1, HW), 1) % W
    not_first_col = jnp.broadcast_to(col != 0, (Cin, HW))        # for dx == -1
    not_last_col = jnp.broadcast_to(col != (W - 1), (Cin, HW))   # for dx == +1

    for dh in range(3):
        for dw in range(3):
            dy, dx = dh - 1, dw - 1
            off = PAD + dy * W + dx          # flat shift of this tap
            k = dh * 3 + dw
            for n in range(NB):
                tap = xpad_ref[n, :, off:off + HW]       # (Cin, HW)
                if dx == 1:
                    tap = jnp.where(not_last_col, tap, 0.0)
                elif dx == -1:
                    tap = jnp.where(not_first_col, tap, 0.0)
                # 8-aligned sublane offset, 128-aligned lane offset.
                patches_ref[k * Cpad:k * Cpad + Cin,
                            n * HW:(n + 1) * HW] = tap

    # --- all 9 taps + bias in ONE MXU matmul ------------------------------------
    acc = lax.dot_general(
        w_ref[...], patches_ref[...],
        dimension_numbers=(((1,), (0,)), ((), ())),
        preferred_element_type=jnp.float32)              # (Cout, NB*HW) f32

    out = jnp.where(acc >= 0, acc, negative_slope * acc)  # LeakyReLU(0.2)
    for n in range(NB):                                   # lane-dense stores
        o_ref[n] = out[:, n * HW:(n + 1) * HW].astype(o_ref.dtype)


def deconv_block_forward(x_nchw, weight, bias, *, negative_slope=0.2,
                         batch_block=None):
    """DeConvBlock forward: ConvTranspose2d(Cin, Cout, 3, stride=1, padding=1)
    followed by LeakyReLU(negative_slope).

    x_nchw : (N, Cin, H, W)      float32   (PyTorch NCHW)
    weight : (Cin, Cout, 3, 3)   float32   (PyTorch ConvTranspose2d layout)
    bias   : (Cout,)             float32
    returns: (N, Cout, H, W)     float32
    """
    N, Cin, H, W = x_nchw.shape
    Cout = weight.shape[1]
    HW = H * W

    # Channels-per-tap padded to a full 8-sublane group so im2col staging stores
    # are sublane-aligned; a spare padded slot also hosts the folded bias.
    Cpad = max(8, ((Cin + 7) // 8) * 8)
    if Cin < Cpad:
        K = 9 * Cpad
        bias_row = K - 1            # unused padded slot of the last tap
    else:
        K = 9 * Cpad + 8            # append an extra aligned group for the bias
        bias_row = 9 * Cpad

    # Left/right lane padding of the flattened image: >= W+1 and 128-aligned so
    # the in-kernel copy store stays lane-aligned.
    PAD = ((W + 1 + 127) // 128) * 128

    # ConvTranspose2d(k=3, s=1, p=1) == correlation with the spatially flipped
    # kernel: W_eff[co, ci, dh, dw] = weight[ci, co, 2-dh, 2-dw].  Lay it out as
    # (Cout, K) with column index (dh*3 + dw)*Cpad + ci to match the kernel's
    # patch staging order; fold the bias into column `bias_row`.
    w_flip = weight[:, :, ::-1, ::-1]                      # [ci, co, dh, dw]
    w_perm = jnp.transpose(w_flip, (2, 3, 0, 1))           # [dh, dw, ci, co]
    w_perm = jnp.pad(w_perm, ((0, 0), (0, 0), (0, Cpad - Cin), (0, 0)))
    w2 = w_perm.reshape(9 * Cpad, Cout)
    if K > 9 * Cpad:
        w2 = jnp.concatenate([w2, jnp.zeros((K - 9 * Cpad, Cout), w2.dtype)], 0)
    w2 = w2.at[bias_row, :].set(bias.astype(w2.dtype))
    w2 = w2.T                                              # (Cout, K)

    # Free, contiguous reshape: NCHW -> (N, Cin, H*W).  No pad, no copy.
    x_flat = x_nchw.reshape(N, Cin, HW)

    # Whole batch in one grid step by default (per-step overhead dominates at
    # these sizes); batch_block re-introduces a "parallel" axis if wanted.
    nb = N if (batch_block is None or N % batch_block != 0) else batch_block
    grid = (N // nb,)

    # Derive the VMEM budget instead of hard-coding (v7x has only 64 MiB):
    # double-buffered in/out blocks + both staging scratches + headroom.
    block_bytes = 4 * (nb * Cin * HW + Cout * K + nb * Cout * HW)
    scratch_bytes = 4 * (nb * Cin * (2 * PAD + HW) + K * nb * HW)
    vmem_limit = int(min(64 << 20,
                         max(8 << 20, 2 * block_bytes + scratch_bytes + (2 << 20))))

    kernel = functools.partial(
        _deconv_leakyrelu_kernel, Cin=Cin, Cpad=Cpad, W=W, HW=HW, NB=nb,
        PAD=PAD, bias_row=bias_row, negative_slope=negative_slope)

    out_flat = pl.pallas_call(
        kernel,
        out_shape=jax.ShapeDtypeStruct((N, Cout, HW), x_nchw.dtype),
        grid=grid,
        in_specs=[
            pl.BlockSpec((nb, Cin, HW), lambda i: (i, 0, 0)),
            pl.BlockSpec((Cout, K), lambda i: (0, 0)),
        ],
        out_specs=pl.BlockSpec((nb, Cout, HW), lambda i: (i, 0, 0)),
        scratch_shapes=[
            pltpu.VMEM((nb, Cin, 2 * PAD + HW), jnp.float32),
            pltpu.VMEM((K, nb * HW), jnp.float32),
        ],
        compiler_params=pltpu.CompilerParams(
            dimension_semantics=("parallel",),
            vmem_limit_bytes=vmem_limit,
        ),
    )(x_flat, w2)

    # Free reshape back to NCHW; no crop needed (output is tightly packed).
    return out_flat.reshape(N, Cout, H, W)


def _reference(x_nchw, weight, bias, negative_slope=0.2):
    """Pure-JAX reference: ConvTranspose2d(s=1,p=1,k=3) == conv w/ flipped kernel."""
    x_nhwc = jnp.transpose(x_nchw, (0, 2, 3, 1))
    w_hwio = jnp.transpose(weight, (2, 3, 0, 1))          # (3,3,Cin,Cout)
    w_flip = w_hwio[::-1, ::-1, :, :]
    y = lax.conv_general_dilated(
        x_nhwc, w_flip, window_strides=(1, 1), padding="SAME",
        dimension_numbers=("NHWC", "HWIO", "NHWC"))
    y = y + bias[None, None, None, :]
    y = jnp.where(y >= 0, y, negative_slope * y)
    return jnp.transpose(y, (0, 3, 1, 2))


if __name__ == "__main__":
    # DeConvBlock(ndims=2, in_channels=4, out_channels=8, stride=1)
    N, Cin, Cout, H, W = 2, 4, 8, 16, 16

    key = jax.random.PRNGKey(0)
    kx, kw, kb = jax.random.split(key, 3)
    x = jax.random.normal(kx, (N, Cin, H, W), dtype=jnp.float32)
    fan = Cin * 3 * 3
    bound = 1.0 / (fan ** 0.5)
    weight = jax.random.uniform(kw, (Cin, Cout, 3, 3), jnp.float32, -bound, bound)
    bias = jax.random.uniform(kb, (Cout,), jnp.float32, -bound, bound)

    ref = _reference(x, weight, bias)

    fwd = jax.jit(deconv_block_forward)
    out = jax.block_until_ready(fwd(x, weight, bias))
    assert out.shape == (N, Cout, H, W)
    assert jnp.allclose(out, ref, atol=1e-4, rtol=1e-4), "mismatch vs reference"

    print("KERNEL_OK")
</pallas_src>

<mosaic_0001>
module attributes {stable_mosaic.version = 11 : i64} {
  func.func @_deconv_leakyrelu_kernel(%arg0: i32, %arg1: memref<2x4x256xf32, #tpu.memory_space<vmem>>, %arg2: memref<8x72xf32, #tpu.memory_space<vmem>>, %arg3: memref<2x8x256xf32, #tpu.memory_space<vmem>>, %arg4: memref<2x4x512xf32, #tpu.memory_space<vmem>>, %arg5: memref<72x512xf32, #tpu.memory_space<vmem>>) attributes {dimension_semantics = [#tpu.dimension_semantics<parallel>], iteration_bounds = array<i64: 1>, scalar_prefetch = 0 : i64, scratch_operands = 2 : i64, tpu.core_type = #tpu.core_type<tc>, window_params = [{transform_indices = @transform_0, window_bounds = array<i64: 2, 4, 256>}, {pipeline_mode = #tpu.pipeline_mode<synchronous>, transform_indices = @transform_1, window_bounds = array<i64: 8, 72>}, {transform_indices = @transform_2, window_bounds = array<i64: 2, 8, 256>}]} {
    %cst = arith.constant 0.000000e+00 : f32
    %0 = vector.broadcast %cst : f32 to vector<2x4x512xf32>
    %c0 = arith.constant 0 : index
    %c0_0 = arith.constant 0 : index
    %c0_1 = arith.constant 0 : index
    %1 = vector.load %arg4[%c0, %c0_0, %c0_1] : memref<2x4x512xf32, #tpu.memory_space<vmem>>, vector<2x4x512xf32>
    tpu.vector_store %arg4[%c0, %c0_0, %c0_1], %0 {strides = array<i32>} : memref<2x4x512xf32, #tpu.memory_space<vmem>>, vector<2x4x512xf32>,
    %c0_2 = arith.constant 0 : index
    %c0_3 = arith.constant 0 : index
    %c0_4 = arith.constant 0 : index
    %2 = vector.load %arg1[%c0_2, %c0_3, %c0_4] : memref<2x4x256xf32, #tpu.memory_space<vmem>>, vector<2x4x256xf32>
    %c0_5 = arith.constant 0 : index
    %c0_6 = arith.constant 0 : index
    %c128 = arith.constant 128 : index
    %3 = vector.load %arg4[%c0_5, %c0_6, %c128] : memref<2x4x512xf32, #tpu.memory_space<vmem>>, vector<2x4x256xf32>
    tpu.vector_store %arg4[%c0_5, %c0_6, %c128], %2 {strides = array<i32>} : memref<2x4x512xf32, #tpu.memory_space<vmem>>, vector<2x4x256xf32>,
    %4 = tpu.iota {dimensions = array<i32: 0>} : vector<72x512xi32>
    %c71_i32 = arith.constant 71 : i32
    %5 = vector.broadcast %c71_i32 : i32 to vector<72x512xi32>
    %6 = arith.cmpi eq, %4, %5 : vector<72x512xi32>
    %7 = arith.extui %6 : vector<72x512xi1> to vector<72x512xi32>
    %8 = arith.sitofp %7 : vector<72x512xi32> to vector<72x512xf32>
    %c0_7 = arith.constant 0 : index
    %c0_8 = arith.constant 0 : index
    %9 = vector.load %arg5[%c0_7, %c0_8] : memref<72x512xf32, #tpu.memory_space<vmem>>, vector<72x512xf32>
    tpu.vector_store %arg5[%c0_7, %c0_8], %8 {strides = array<i32>} : memref<72x512xf32, #tpu.memory_space<vmem>>, vector<72x512xf32>,
    %10 = tpu.iota {dimensions = array<i32: 1>} : vector<1x256xi32>
    %c16_i32 = arith.constant 16 : i32
    %c0_i32 = arith.constant 0 : i32
    %11 = arith.cmpi eq, %c16_i32, %c0_i32 : i32
    %c1_i32 = arith.constant 1 : i32
    %12 = arith.select %11, %c1_i32, %c16_i32 : i32
    %13 = vector.broadcast %12 : i32 to vector<1x256xi32>
    %14 = arith.remsi %10, %13 : vector<1x256xi32>
    %c0_i32_9 = arith.constant 0 : i32
    %15 = vector.broadcast %c0_i32_9 : i32 to vector<1x256xi32>
    %16 = arith.cmpi ne, %14, %15 : vector<1x256xi32>
    %c0_i32_10 = arith.constant 0 : i32
    %17 = vector.broadcast %c0_i32_10 : i32 to vector<1x256xi32>
    %18 = arith.cmpi slt, %14, %17 : vector<1x256xi32>
    %c0_i32_11 = arith.constant 0 : i32
    %19 = arith.cmpi slt, %12, %c0_i32_11 : i32
    %20 = vector.broadcast %19 : i1 to vector<1x256xi1>
    %21 = vector.broadcast %20 : vector<1x256xi1> to vector<1x256xi1>
    %22 = arith.xori %18, %21 : vector<1x256xi1>
    %23 = arith.andi %22, %16 : vector<1x256xi1>
    %24 = vector.broadcast %12 : i32 to vector<1x256xi32>
    %25 = arith.addi %14, %24 : vector<1x256xi32>
    %26 = arith.select %23, %25, %14 : vector<1x256xi1>, vector<1x256xi32>
    %c0_i32_12 = arith.constant 0 : i32
    %27 = vector.broadcast %c0_i32_12 : i32 to vector<1x256xi32>
    %28 = arith.cmpi ne, %26, %27 : vector<1x256xi32>
    %29 = vector.shape_cast %28 : vector<1x256xi1> to vector<1x256xi1>
    %30 = vector.broadcast %29 : vector<1x256xi1> to vector<4x256xi1>
    %c15_i32 = arith.constant 15 : i32
    %31 = vector.broadcast %c15_i32 : i32 to vector<1x256xi32>
    %32 = arith.cmpi ne, %26, %31 : vector<1x256xi32>
    %33 = vector.shape_cast %32 : vector<1x256xi1> to vector<1x256xi1>
    %34 = vector.broadcast %33 : vector<1x256xi1> to vector<4x256xi1>
    %c0_13 = arith.constant 0 : index
    %c0_14 = arith.constant 0 : index
    %c111 = arith.constant 111 : index
    %35 = vector.load %arg4[%c0_13, %c0_14, %c111] : memref<2x4x512xf32, #tpu.memory_space<vmem>>, vector<1x4x256xf32>
    %36 = vector.shape_cast %35 : vector<1x4x256xf32> to vector<4x256xf32>
    %cst_15 = arith.constant 0.000000e+00 : f32
    %37 = vector.broadcast %cst_15 : f32 to vector<4x256xf32>
    %38 = arith.select %30, %36, %37 : vector<4x256xi1>, vector<4x256xf32>
    %c0_16 = arith.constant 0 : index
    %c0_17 = arith.constant 0 : index
    %39 = vector.load %arg5[%c0_16, %c0_17] : memref<72x512xf32, #tpu.memory_space<vmem>>, vector<4x256xf32>
    tpu.vector_store %arg5[%c0_16, %c0_17], %38 {strides = array<i32>} : memref<72x512xf32, #tpu.memory_space<vmem>>, vector<4x256xf32>,
    %c1 = arith.constant 1 : index
    %c0_18 = arith.constant 0 : index
    %c111_19 = arith.constant 111 : index
    %40 = vector.load %arg4[%c1, %c0_18, %c111_19] : memref<2x4x512xf32, #tpu.memory_space<vmem>>, vector<1x4x256xf32>
    %41 = vector.shape_cast %40 : vector<1x4x256xf32> to vector<4x256xf32>
    %cst_20 = arith.constant 0.000000e+00 : f32
    %42 = vector.broadcast %cst_20 : f32 to vector<4x256xf32>
    %43 = arith.select %30, %41, %42 : vector<4x256xi1>, vector<4x256xf32>
    %c0_21 = arith.constant 0 : index
    %c256 = arith.constant 256 : index
    %44 = vector.load %arg5[%c0_21, %c256] : memref<72x512xf32, #tpu.memory_space<vmem>>, vector<4x256xf32>
    tpu.vector_store %arg5[%c0_21, %c256], %43 {strides = array<i32>} : memref<72x512xf32, #tpu.memory_space<vmem>>, vector<4x256xf32>,
    %c0_22 = arith.constant 0 : index
    %c0_23 = arith.constant 0 : index
    %c112 = arith.constant 112 : index
    %45 = vector.load %arg4[%c0_22, %c0_23, %c112] : memref<2x4x512xf32, #tpu.memory_space<vmem>>, vector<1x4x256xf32>
    %46 = vector.shape_cast %45 : vector<1x4x256xf32> to vector<4x256xf32>
    %c8 = arith.constant 8 : index
    %c0_24 = arith.constant 0 : index
    %47 = vector.load %arg5[%c8, %c0_24] : memref<72x512xf32, #tpu.memory_space<vmem>>, vector<4x256xf32>
    tpu.vector_store %arg5[%c8, %c0_24], %46 {strides = array<i32>} : memref<72x512xf32, #tpu.memory_space<vmem>>, vector<4x256xf32>,
    %c1_25 = arith.constant 1 : index
    %c0_26 = arith.constant 0 : index
    %c112_27 = arith.constant 112 : index
    %48 = vector.load %arg4[%c1_25, %c0_26, %c112_27] : memref<2x4x512xf32, #tpu.memory_space<vmem>>, vector<1x4x256xf32>
    %49 = vector.shape_cast %48 : vector<1x4x256xf32> to vector<4x256xf32>
    %c8_28 = arith.constant 8 : index
    %c256_29 = arith.constant 256 : index
    %50 = vector.load %arg5[%c8_28, %c256_29] : memref<72x512xf32, #tpu.memory_space<vmem>>, vector<4x256xf32>
    tpu.vector_store %arg5[%c8_28, %c256_29], %49 {strides = array<i32>} : memref<72x512xf32, #tpu.memory_space<vmem>>, vector<4x256xf32>,
    %c0_30 = arith.constant 0 : index
    %c0_31 = arith.constant 0 : index
    %c113 = arith.constant 113 : index
    %51 = vector.load %arg4[%c0_30, %c0_31, %c113] : memref<2x4x512xf32, #tpu.memory_space<vmem>>, vector<1x4x256xf32>
    %52 = vector.shape_cast %51 : vector<1x4x256xf32> to vector<4x256xf32>
    %cst_32 = arith.constant 0.000000e+00 : f32
    %53 = vector.broadcast %cst_32 : f32 to vector<4x256xf32>
    %54 = arith.select %34, %52, %53 : vector<4x256xi1>, vector<4x256xf32>
    %c16 = arith.constant 16 : index
    %c0_33 = arith.constant 0 : index
    %55 = vector.load %arg5[%c16, %c0_33] : memref<72x512xf32, #tpu.memory_space<vmem>>, vector<4x256xf32>
    tpu.vector_store %arg5[%c16, %c0_33], %54 {strides = array<i32>} : memref<72x512xf32, #tpu.memory_space<vmem>>, vector<4x256xf32>,
    %c1_34 = arith.constant 1 : index
    %c0_35 = arith.constant 0 : index
    %c113_36 = arith.constant 113 : index
    %56 = vector.load %arg4[%c1_34, %c0_35, %c113_36] : memref<2x4x512xf32, #tpu.memory_space<vmem>>, vector<1x4x256xf32>
    %57 = vector.shape_cast %56 : vector<1x4x256xf32> to vector<4x256xf32>
    %cst_37 = arith.constant 0.000000e+00 : f32
    %58 = vector.broadcast %cst_37 : f32 to vector<4x256xf32>
    %59 = arith.select %34, %57, %58 : vector<4x256xi1>, vector<4x256xf32>
    %c16_38 = arith.constant 16 : index
    %c256_39 = arith.constant 256 : index
    %60 = vector.load %arg5[%c16_38, %c256_39] : memref<72x512xf32, #tpu.memory_space<vmem>>, vector<4x256xf32>
    tpu.vector_store %arg5[%c16_38, %c256_39], %59 {strides = array<i32>} : memref<72x512xf32, #tpu.memory_space<vmem>>, vector<4x256xf32>,
    %c0_40 = arith.constant 0 : index
    %c0_41 = arith.constant 0 : index
    %c127 = arith.constant 127 : index
    %61 = vector.load %arg4[%c0_40, %c0_41, %c127] : memref<2x4x512xf32, #tpu.memory_space<vmem>>, vector<1x4x256xf32>
    %62 = vector.shape_cast %61 : vector<1x4x256xf32> to vector<4x256xf32>
    %cst_42 = arith.constant 0.000000e+00 : f32
    %63 = vector.broadcast %cst_42 : f32 to vector<4x256xf32>
    %64 = arith.select %30, %62, %63 : vector<4x256xi1>, vector<4x256xf32>
    %c24 = arith.constant 24 : index
    %c0_43 = arith.constant 0 : index
    %65 = vector.load %arg5[%c24, %c0_43] : memref<72x512xf32, #tpu.memory_space<vmem>>, vector<4x256xf32>
    tpu.vector_store %arg5[%c24, %c0_43], %64 {strides = array<i32>} : memref<72x512xf32, #tpu.memory_space<vmem>>, vector<4x256xf32>,
    %c1_44 = arith.constant 1 : index
    %c0_45 = arith.constant 0 : index
    %c127_46 = arith.constant 127 : index
    %66 = vector.load %arg4[%c1_44, %c0_45, %c127_46] : memref<2x4x512xf32, #tpu.memory_space<vmem>>, vector<1x4x256xf32>
    %67 = vector.shape_cast %66 : vector<1x4x256xf32> to vector<4x256xf32>
    %cst_47 = arith.constant 0.000000e+00 : f32
    %68 = vector.broadcast %cst_47 : f32 to vector<4x256xf32>
    %69 = arith.select %30, %67, %68 : vector<4x256xi1>, vector<4x256xf32>
    %c24_48 = arith.constant 24 : index
    %c256_49 = arith.constant 256 : index
    %70 = vector.load %arg5[%c24_48, %c256_49] : memref<72x512xf32, #tpu.memory_space<vmem>>, vector<4x256xf32>
    tpu.vector_store %arg5[%c24_48, %c256_49], %69 {strides = array<i32>} : memref<72x512xf32, #tpu.memory_space<vmem>>, vector<4x256xf32>,
    %c0_50 = arith.constant 0 : index
    %c0_51 = arith.constant 0 : index
    %c128_52 = arith.constant 128 : index
    %71 = vector.load %arg4[%c0_50, %c0_51, %c128_52] : memref<2x4x512xf32, #tpu.memory_space<vmem>>, vector<1x4x256xf32>
    %72 = vector.shape_cast %71 : vector<1x4x256xf32> to vector<4x256xf32>
    %c32 = arith.constant 32 : index
    %c0_53 = arith.constant 0 : index
    %73 = vector.load %arg5[%c32, %c0_53] : memref<72x512xf32, #tpu.memory_space<vmem>>, vector<4x256xf32>
    tpu.vector_store %arg5[%c32, %c0_53], %72 {strides = array<i32>} : memref<72x512xf32, #tpu.memory_space<vmem>>, vector<4x256xf32>,
    %c1_54 = arith.constant 1 : index
    %c0_55 = arith.constant 0 : index
    %c128_56 = arith.constant 128 : index
    %74 = vector.load %arg4[%c1_54, %c0_55, %c128_56] : memref<2x4x512xf32, #tpu.memory_space<vmem>>, vector<1x4x256xf32>
    %75 = vector.shape_cast %74 : vector<1x4x256xf32> to vector<4x256xf32>
    %c32_57 = arith.constant 32 : index
    %c256_58 = arith.constant 256 : index
    %76 = vector.load %arg5[%c32_57, %c256_58] : memref<72x512xf32, #tpu.memory_space<vmem>>, vector<4x256xf32>
    tpu.vector_store %arg5[%c32_57, %c256_58], %75 {strides = array<i32>} : memref<72x512xf32, #tpu.memory_space<vmem>>, vector<4x256xf32>,
    %c0_59 = arith.constant 0 : index
    %c0_60 = arith.constant 0 : index
    %c129 = arith.constant 129 : index
    %77 = vector.load %arg4[%c0_59, %c0_60, %c129] : memref<2x4x512xf32, #tpu.memory_space<vmem>>, vector<1x4x256xf32>
    %78 = vector.shape_cast %77 : vector<1x4x256xf32> to vector<4x256xf32>
    %cst_61 = arith.constant 0.000000e+00 : f32
    %79 = vector.broadcast %cst_61 : f32 to vector<4x256xf32>
    %80 = arith.select %34, %78, %79 : vector<4x256xi1>, vector<4x256xf32>
    %c40 = arith.constant 40 : index
    %c0_62 = arith.constant 0 : index
    %81 = vector.load %arg5[%c40, %c0_62] : memref<72x512xf32, #tpu.memory_space<vmem>>, vector<4x256xf32>
    tpu.vector_store %arg5[%c40, %c0_62], %80 {strides = array<i32>} : memref<72x512xf32, #tpu.memory_space<vmem>>, vector<4x256xf32>,
    %c1_63 = arith.constant 1 : index
    %c0_64 = arith.constant 0 : index
    %c129_65 = arith.constant 129 : index
    %82 = vector.load %arg4[%c1_63, %c0_64, %c129_65] : memref<2x4x512xf32, #tpu.memory_space<vmem>>, vector<1x4x256xf32>
    %83 = vector.shape_cast %82 : vector<1x4x256xf32> to vector<4x256xf32>
    %cst_66 = arith.constant 0.000000e+00 : f32
    %84 = vector.broadcast %cst_66 : f32 to vector<4x256xf32>
    %85 = arith.select %34, %83, %84 : vector<4x256xi1>, vector<4x256xf32>
    %c40_67 = arith.constant 40 : index
    %c256_68 = arith.constant 256 : index
    %86 = vector.load %arg5[%c40_67, %c256_68] : memref<72x512xf32, #tpu.memory_space<vmem>>, vector<4x256xf32>
    tpu.vector_store %arg5[%c40_67, %c256_68], %85 {strides = array<i32>} : memref<72x512xf32, #tpu.memory_space<vmem>>, vector<4x256xf32>,
    %c0_69 = arith.constant 0 : index
    %c0_70 = arith.constant 0 : index
    %c143 = arith.constant 143 : index
    %87 = vector.load %arg4[%c0_69, %c0_70, %c143] : memref<2x4x512xf32, #tpu.memory_space<vmem>>, vector<1x4x256xf32>
    %88 = vector.shape_cast %87 : vector<1x4x256xf32> to vector<4x256xf32>
    %cst_71 = arith.constant 0.000000e+00 : f32
    %89 = vector.broadcast %cst_71 : f32 to vector<4x256xf32>
    %90 = arith.select %30, %88, %89 : vector<4x256xi1>, vector<4x256xf32>
    %c48 = arith.constant 48 : index
    %c0_72 = arith.constant 0 : index
    %91 = vector.load %arg5[%c48, %c0_72] : memref<72x512xf32, #tpu.memory_space<vmem>>, vector<4x256xf32>
    tpu.vector_store %arg5[%c48, %c0_72], %90 {strides = array<i32>} : memref<72x512xf32, #tpu.memory_space<vmem>>, vector<4x256xf32>,
    %c1_73 = arith.constant 1 : index
    %c0_74 = arith.constant 0 : index
    %c143_75 = arith.constant 143 : index
    %92 = vector.load %arg4[%c1_73, %c0_74, %c143_75] : memref<2x4x512xf32, #tpu.memory_space<vmem>>, vector<1x4x256xf32>
    %93 = vector.shape_cast %92 : vector<1x4x256xf32> to vector<4x256xf32>
    %cst_76 = arith.constant 0.000000e+00 : f32
    %94 = vector.broadcast %cst_76 : f32 to vector<4x256xf32>
    %95 = arith.select %30, %93, %94 : vector<4x256xi1>, vector<4x256xf32>
    %c48_77 = arith.constant 48 : index
    %c256_78 = arith.constant 256 : index
    %96 = vector.load %arg5[%c48_77, %c256_78] : memref<72x512xf32, #tpu.memory_space<vmem>>, vector<4x256xf32>
    tpu.vector_store %arg5[%c48_77, %c256_78], %95 {strides = array<i32>} : memref<72x512xf32, #tpu.memory_space<vmem>>, vector<4x256xf32>,
    %c0_79 = arith.constant 0 : index
    %c0_80 = arith.constant 0 : index
    %c144 = arith.constant 144 : index
    %97 = vector.load %arg4[%c0_79, %c0_80, %c144] : memref<2x4x512xf32, #tpu.memory_space<vmem>>, vector<1x4x256xf32>
    %98 = vector.shape_cast %97 : vector<1x4x256xf32> to vector<4x256xf32>
    %c56 = arith.constant 56 : index
    %c0_81 = arith.constant 0 : index
    %99 = vector.load %arg5[%c56, %c0_81] : memref<72x512xf32, #tpu.memory_space<vmem>>, vector<4x256xf32>
    tpu.vector_store %arg5[%c56, %c0_81], %98 {strides = array<i32>} : memref<72x512xf32, #tpu.memory_space<vmem>>, vector<4x256xf32>,
    %c1_82 = arith.constant 1 : index
    %c0_83 = arith.constant 0 : index
    %c144_84 = arith.constant 144 : index
    %100 = vector.load %arg4[%c1_82, %c0_83, %c144_84] : memref<2x4x512xf32, #tpu.memory_space<vmem>>, vector<1x4x256xf32>
    %101 = vector.shape_cast %100 : vector<1x4x256xf32> to vector<4x256xf32>
    %c56_85 = arith.constant 56 : index
    %c256_86 = arith.constant 256 : index
    %102 = vector.load %arg5[%c56_85, %c256_86] : memref<72x512xf32, #tpu.memory_space<vmem>>, vector<4x256xf32>
    tpu.vector_store %arg5[%c56_85, %c256_86], %101 {strides = array<i32>} : memref<72x512xf32, #tpu.memory_space<vmem>>, vector<4x256xf32>,
    %c0_87 = arith.constant 0 : index
    %c0_88 = arith.constant 0 : index
    %c145 = arith.constant 145 : index
    %103 = vector.load %arg4[%c0_87, %c0_88, %c145] : memref<2x4x512xf32, #tpu.memory_space<vmem>>, vector<1x4x256xf32>
    %104 = vector.shape_cast %103 : vector<1x4x256xf32> to vector<4x256xf32>
    %cst_89 = arith.constant 0.000000e+00 : f32
    %105 = vector.broadcast %cst_89 : f32 to vector<4x256xf32>
    %106 = arith.select %34, %104, %105 : vector<4x256xi1>, vector<4x256xf32>
    %c64 = arith.constant 64 : index
    %c0_90 = arith.constant 0 : index
    %107 = vector.load %arg5[%c64, %c0_90] : memref<72x512xf32, #tpu.memory_space<vmem>>, vector<4x256xf32>
    tpu.vector_store %arg5[%c64, %c0_90], %106 {strides = array<i32>} : memref<72x512xf32, #tpu.memory_space<vmem>>, vector<4x256xf32>,
    %c1_91 = arith.constant 1 : index
    %c0_92 = arith.constant 0 : index
    %c145_93 = arith.constant 145 : index
    %108 = vector.load %arg4[%c1_91, %c0_92, %c145_93] : memref<2x4x512xf32, #tpu.memory_space<vmem>>, vector<1x4x256xf32>
    %109 = vector.shape_cast %108 : vector<1x4x256xf32> to vector<4x256xf32>
    %cst_94 = arith.constant 0.000000e+00 : f32
    %110 = vector.broadcast %cst_94 : f32 to vector<4x256xf32>
    %111 = arith.select %34, %109, %110 : vector<4x256xi1>, vector<4x256xf32>
    %c64_95 = arith.constant 64 : index
    %c256_96 = arith.constant 256 : index
    %112 = vector.load %arg5[%c64_95, %c256_96] : memref<72x512xf32, #tpu.memory_space<vmem>>, vector<4x256xf32>
    tpu.vector_store %arg5[%c64_95, %c256_96], %111 {strides = array<i32>} : memref<72x512xf32, #tpu.memory_space<vmem>>, vector<4x256xf32>,
    %c0_97 = arith.constant 0 : index
    %c0_98 = arith.constant 0 : index
    %113 = vector.load %arg2[%c0_97, %c0_98] : memref<8x72xf32, #tpu.memory_space<vmem>>, vector<8x72xf32>
    %c0_99 = arith.constant 0 : index
    %c0_100 = arith.constant 0 : index
    %114 = vector.load %arg5[%c0_99, %c0_100] : memref<72x512xf32, #tpu.memory_space<vmem>>, vector<72x512xf32>
    %cst_101 = arith.constant dense<0.000000e+00> : vector<8x512xf32>
    %115 = tpu.matmul %113, %114, %cst_101 {dimension_numbers = #tpu.dot_dimension_numbers<[1], [0], [0], [1], [0, 0, 1, 1], [], []>} : vector<8x72xf32>, vector<72x512xf32>, vector<8x512xf32> -> vector<8x512xf32>
    %cst_102 = arith.constant 0.000000e+00 : f32
    %116 = vector.broadcast %cst_102 : f32 to vector<8x512xf32>
    %117 = arith.cmpf oge, %115, %116 : vector<8x512xf32>
    %cst_103 = arith.constant 2.000000e-01 : f32
    %118 = vector.broadcast %cst_103 : f32 to vector<8x512xf32>
    %119 = arith.mulf %118, %115 : vector<8x512xf32>
    %120 = arith.select %117, %115, %119 : vector<8x512xi1>, vector<8x512xf32>
    %121 = vector.extract_strided_slice %120 {offsets = [0, 0], sizes = [8, 256], strides = [1, 1]} : vector<8x512xf32> to vector<8x256xf32>
    %c0_104 = arith.constant 0 : index
    %c0_105 = arith.constant 0 : index
    %c0_106 = arith.constant 0 : index
    %122 = vector.load %arg3[%c0_104, %c0_105, %c0_106] : memref<2x8x256xf32, #tpu.memory_space<vmem>>, vector<1x8x256xf32>
    %123 = vector.shape_cast %122 : vector<1x8x256xf32> to vector<8x256xf32>
    %124 = vector.shape_cast %121 : vector<8x256xf32> to vector<1x8x256xf32>
    tpu.vector_store %arg3[%c0_104, %c0_105, %c0_106], %124 {strides = array<i32>} : memref<2x8x256xf32, #tpu.memory_space<vmem>>, vector<1x8x256xf32>,
    %125 = vector.extract_strided_slice %120 {offsets = [0, 256], sizes = [8, 256], strides = [1, 1]} : vector<8x512xf32> to vector<8x256xf32>
    %c1_107 = arith.constant 1 : index
    %c0_108 = arith.constant 0 : index
    %c0_109 = arith.constant 0 : index
    %126 = vector.load %arg3[%c1_107, %c0_108, %c0_109] : memref<2x8x256xf32, #tpu.memory_space<vmem>>, vector<1x8x256xf32>
    %127 = vector.shape_cast %126 : vector<1x8x256xf32> to vector<8x256xf32>
    %128 = vector.shape_cast %125 : vector<8x256xf32> to vector<1x8x256xf32>
    tpu.vector_store %arg3[%c1_107, %c0_108, %c0_109], %128 {strides = array<i32>} : memref<2x8x256xf32, #tpu.memory_space<vmem>>, vector<1x8x256xf32>,
    return
  }
  func.func @transform_0(%arg0: i32) -> (i32, i32, i32) {
    %c0_i32 = arith.constant 0 : i32
    %c0_i32_0 = arith.constant 0 : i32
    %c0_i32_1 = arith.constant 0 : i32
    return %arg0, %c0_i32, %c0_i32_0 : i32, i32, i32
  }
  func.func @transform_1(%arg0: i32) -> (i32, i32) {
    %c0_i32 = arith.constant 0 : i32
    %c0_i32_0 = arith.constant 0 : i32
    %c0_i32_1 = arith.constant 0 : i32
    return %c0_i32, %c0_i32_0 : i32, i32
  }
  func.func @transform_2(%arg0: i32) -> (i32, i32, i32) {
    %c0_i32 = arith.constant 0 : i32
    %c0_i32_0 = arith.constant 0 : i32
    %c0_i32_1 = arith.constant 0 : i32
    return %arg0, %c0_i32, %c0_i32_0 : i32, i32, i32
  }
}

</mosaic_0001>

<llo_original>
// kernel: deconv_block_forward.1
$region0: #{deconv_block_forward.1}
  #allocation0 [shape = 'u32[]', space=smem, size = 0x4, offset = 0x4, fixed_abs, tag = 'smem constant byte address 0x4 - core index']
  #allocation1 [shape = 'u32[144,128]{1,0:T(1,128)}', space=vmem, size = 0x12000, scoped, tag = 'internal scratch']
  #allocation2 [shape = 'f32[2,4,512]{2,1,0:T(4,128)}', space=vmem, size = 0x4000, scoped, tag = 'scratch operand']
  #allocation3 [shape = 'f32[72,512]{1,0:T(8,128)}', space=vmem, size = 0x24000, scoped, tag = 'scratch operand']
  %s0 = inlined_call_operand.vmem [shape: f32[2,4,256], index: 0, kind: input, shape index: {}]
  %s1 = inlined_call_operand.vmem [shape: f32[8,72], index: 1, kind: input, shape index: {}]
  %s2 = inlined_call_operand.vmem [shape: f32[2,8,256], index: 2, kind: output, shape index: {}]
  %s3 = sld [smem:[#allocation0]]
  $region18: #{deconv_block_forward.1} parent=0
    _
  %s5 = ssub.s32 1, %s3
  %s6 = scalar_select 0, %s5, %s3
  // Predicated region
  $region2: #{deconv_block_forward.1} parent=0 // pred_check
    _
  $region3: #{deconv_block_forward.1} parent=0 // pred_check_branch
    %8 = sbr.rel (0) target = $region5
  $region4: #{deconv_block_forward.1} parent=0 // pred_region
    _
  $region5: #{deconv_block_forward.1} parent=0 // pred_fallthru
    _
  // Predicated region
  $region6: #{deconv_block_forward.1} parent=0 // pred_check
    _
  $region7: #{deconv_block_forward.1} parent=0 // pred_check_branch
    %10 = sbr.rel (0) target = $region9
  $region8: #{deconv_block_forward.1} parent=0 // pred_region
    _
  $region9: #{deconv_block_forward.1} parent=0 // pred_fallthru
    _
  %11 = vst [vmem:[#allocation2] sm:$0xff] 0.0
  %12 = vst [vmem:[#allocation2 + $0x8] sm:$0xff] 0.0
  %13 = vst [vmem:[#allocation2 + $0x10] sm:$0xff] 0.0
  %14 = vst [vmem:[#allocation2 + $0x18] sm:$0xff] 0.0
  %v15 = vld [vmem:[%s0] sm:$0xff]
  %v16 = vld [vmem:[%s0 + $0x8] sm:$0xff]
  %17 = vst [vmem:[#allocation2 + $0x4] sm:$0xff] %v15
  %18 = vst [vmem:[#allocation2 + $0x14] sm:$0xff] %v16
  %v19 = vlaneseq
  %v20 = vshrl.u32 %v19, 7
  %v21 = vadd.s32 %v20, 8
  %v22 = vadd.s32 %v20, 16
  %v23 = vadd.s32 %v20, 24
  %v24 = vadd.s32 %v20, 32
  %v25 = vadd.s32 %v20, 40
  %v26 = vadd.s32 %v20, 48
  %v27 = vadd.s32 %v20, 56
  %v28 = vadd.s32 %v20, 64
  %vm29 = vcmp.eq.s32.totalorder %v20, 71
  %vm30 = vcmp.eq.s32.totalorder %v21, 71
  %vm31 = vcmp.eq.s32.totalorder %v22, 71
  %vm32 = vcmp.eq.s32.totalorder %v23, 71
  %vm33 = vcmp.eq.s32.totalorder %v24, 71
  %vm34 = vcmp.eq.s32.totalorder %v25, 71
  %vm35 = vcmp.eq.s32.totalorder %v26, 71
  %vm36 = vcmp.eq.s32.totalorder %v27, 71
  %vm37 = vcmp.eq.s32.totalorder %v28, 71
  %v38 = vsel %vm29, 1, 0
  %v39 = vsel %vm30, 1, 0
  %v40 = vsel %vm31, 1, 0
  %v41 = vsel %vm32, 1, 0
  %v42 = vsel %vm33, 1, 0
  %v43 = vsel %vm34, 1, 0
  %v44 = vsel %vm35, 1, 0
  %v45 = vsel %vm36, 1, 0
  %v46 = vsel %vm37, 1, 0
  %v47 = vcvt.s32.f32 %v38
  %v48 = vcvt.s32.f32 %v39
  %v49 = vcvt.s32.f32 %v40
  %v50 = vcvt.s32.f32 %v41
  %v51 = vcvt.s32.f32 %v42
  %v52 = vcvt.s32.f32 %v43
  %v53 = vcvt.s32.f32 %v44
  %v54 = vcvt.s32.f32 %v45
  %v55 = vcvt.s32.f32 %v46
  %56 = vst [vmem:[#allocation3] sm:$0xff] %v47
  %57 = vst [vmem:[#allocation3 + $0x8] sm:$0xff] %v47
  %58 = vst [vmem:[#allocation3 + $0x10] sm:$0xff] %v47
  %59 = vst [vmem:[#allocation3 + $0x18] sm:$0xff] %v47
  %60 = vst [vmem:[#allocation3 + $0x20] sm:$0xff] %v48
  %61 = vst [vmem:[#allocation3 + $0x28] sm:$0xff] %v48
  %62 = vst [vmem:[#allocation3 + $0x30] sm:$0xff] %v48
  %63 = vst [vmem:[#allocation3 + $0x38] sm:$0xff] %v48
  %64 = vst [vmem:[#allocation3 + $0x40] sm:$0xff] %v49
  %65 = vst [vmem:[#allocation3 + $0x48] sm:$0xff] %v49
  %66 = vst [vmem:[#allocation3 + $0x50] sm:$0xff] %v49
  %67 = vst [vmem:[#allocation3 + $0x58] sm:$0xff] %v49
  %68 = vst [vmem:[#allocation3 + $0x60] sm:$0xff] %v50
  %69 = vst [vmem:[#allocation3 + $0x68] sm:$0xff] %v50
  %70 = vst [vmem:[#allocation3 + $0x70] sm:$0xff] %v50
  %71 = vst [vmem:[#allocation3 + $0x78] sm:$0xff] %v50
  %72 = vst [vmem:[#allocation3 + $0x80] sm:$0xff] %v51
  %73 = vst [vmem:[#allocation3 + $0x88] sm:$0xff] %v51
  %74 = vst [vmem:[#allocation3 + $0x90] sm:$0xff] %v51
  %75 = vst [vmem:[#allocation3 + $0x98] sm:$0xff] %v51
  %76 = vst [vmem:[#allocation3 + $0xa0] sm:$0xff] %v52
  %77 = vst [vmem:[#allocation3 + $0xa8] sm:$0xff] %v52
  %78 = vst [vmem:[#allocation3 + $0xb0] sm:$0xff] %v52
  %79 = vst [vmem:[#allocation3 + $0xb8] sm:$0xff] %v52
  %80 = vst [vmem:[#allocation3 + $0xc0] sm:$0xff] %v53
  %81 = vst [vmem:[#allocation3 + $0xc8] sm:$0xff] %v53
  %82 = vst [vmem:[#allocation3 + $0xd0] sm:$0xff] %v53
  %83 = vst [vmem:[#allocation3 + $0xd8] sm:$0xff] %v53
  %84 = vst [vmem:[#allocation3 + $0xe0] sm:$0xff] %v54
  %85 = vst [vmem:[#allocation3 + $0xe8] sm:$0xff] %v54
  %86 = vst [vmem:[#allocation3 + $0xf0] sm:$0xff] %v54
  %87 = vst [vmem:[#allocation3 + $0xf8] sm:$0xff] %v54
  %88 = vst [vmem:[#allocation3 + $0x100] sm:$0xff] %v55
  %89 = vst [vmem:[#allocation3 + $0x108] sm:$0xff] %v55
  %90 = vst [vmem:[#allocation3 + $0x110] sm:$0xff] %v55
  %91 = vst [vmem:[#allocation3 + $0x118] sm:$0xff] %v55
  %v92 = vlaneseq
  %v93 = vand.u32 %v92, 127
  %v94 = vadd.s32 %v93, 128
  %vm95 = vcmp.lt.s32.totalorder %v93, 0
  %v96 = vsub.s32 0, %v93
  %v97 = vsel %vm95, %v96, %v93
  %v98 = vshrl.u32 %v97, 4
  %v99 = vand.u32 %v97, 15
  %v100 = vsub.s32 0, %v99
  %v101 = vsel %vm95, %v100, %v99
  %vm102 = vcmp.lt.s32.totalorder %v94, 0
  %v103 = vsub.s32 0, %v94
  %v104 = vsel %vm102, %v103, %v94
  %v105 = vshrl.u32 %v104, 4
  %v106 = vand.u32 %v104, 15
  %v107 = vsub.s32 0, %v106
  %v108 = vsel %vm102, %v107, %v106
  %vm109 = vcmp.ne.s32.totalorder %v101, 0
  %vm110 = vcmp.ne.s32.totalorder %v108, 0
  %vm111 = vcmp.lt.s32.totalorder %v101, 0
  %vm112 = vcmp.lt.s32.totalorder %v108, 0
  %vm113 = vmand %vm111, %vm109
  %vm114 = vmand %vm112, %vm110
  %v115 = vadd.s32 %v101, 16
  %v116 = vadd.s32 %v108, 16
  %v117 = vsel %vm113, %v115, %v101
  %v118 = vsel %vm114, %v116, %v108
  %vm119 = vcmp.ne.s32.totalorder %v117, 0
  %vm120 = vcmp.ne.s32.totalorder %v118, 0
  %v121 = vsel %vm119, 1, 0
  %v122 = vsel %vm120, 1, 0
  %vm123 = vcmp.eq.s32.totalorder %v121, 1
  %vm124 = vcmp.eq.s32.totalorder %v122, 1
  %vm125 = vcmp.ne.s32.totalorder %v117, 15
  %vm126 = vcmp.ne.s32.totalorder %v118, 15
  %v127 = vsel %vm125, 1, 0
  %v128 = vsel %vm126, 1, 0
  %vm129 = vcmp.eq.s32.totalorder %v127, 1
  %vm130 = vcmp.eq.s32.totalorder %v128, 1
  %v131 = vld [vmem:[#allocation2] sm:$0xff]
  %v132 = vld [vmem:[#allocation2 + $0x8] sm:$0xf]
  %v135 = vcombine.high %v131, %v131
  %136 = vrot.lane.b32.xlu0 %v131, 17
  %v137 = vpop.permute.xlu0 %136
  %138 = vrot.lane.b32.xlu0 %v135, 17
  %v139 = vpop.permute.xlu0 %138
  %140 = vrot.lane.b32.xlu0 %v132, 17
  %v141 = vpop.permute.xlu0 %140
  %vm142 = vcmask 138240
  %v143 = vsel %vm142, %v137, %v139
  %v144 = vsel %vm142, %v139, %v141
  %v147 = vsel %vm123, %v143, 0.0
  %v148 = vsel %vm124, %v144, 0.0
  %149 = vst [vmem:[#allocation3] sm:$0xf] %v147
  %150 = vst [vmem:[#allocation3 + $0x8] sm:$0xf] %v148
  %s151 = scalar_lea.vmem [#allocation2], 16
  %v152 = vld [vmem:[%s151] sm:$0xff]
  %v153 = vld [vmem:[%s151 + $0x8] sm:$0xf]
  %v156 = vcombine.high %v152, %v152
  %157 = vrot.lane.b32.xlu0 %v152, 17
  %v158 = vpop.permute.xlu0 %157
  %159 = vrot.lane.b32.xlu0 %v156, 17
  %v160 = vpop.permute.xlu0 %159
  %161 = vrot.lane.b32.xlu0 %v153, 17
  %v162 = vpop.permute.xlu0 %161
  %v163 = vsel %vm142, %v158, %v160
  %v164 = vsel %vm142, %v160, %v162
  %v167 = vsel %vm123, %v163, 0.0
  %v168 = vsel %vm124, %v164, 0.0
  %169 = vst [vmem:[#allocation3 + $0x10] sm:$0xf] %v167
  %170 = vst [vmem:[#allocation3 + $0x18] sm:$0xf] %v168
  %v171 = vld [vmem:[#allocation2] sm:$0xff]
  %v172 = vld [vmem:[#allocation2 + $0x8] sm:$0xf]
  %v175 = vcombine.high %v171, %v171
  %176 = vrot.lane.b32.xlu0 %v171, 16
  %v177 = vpop.permute.xlu0 %176
  %178 = vrot.lane.b32.xlu0 %v175, 16
  %v179 = vpop.permute.xlu0 %178
  %180 = vrot.lane.b32.xlu0 %v172, 16
  %v181 = vpop.permute.xlu0 %180
  %vm182 = vcmask 130048
  %v183 = vsel %vm182, %v177, %v179
  %v184 = vsel %vm182, %v179, %v181
  %187 = vst [vmem:[#allocation3 + $0x20] sm:$0xf] %v183
  %188 = vst [vmem:[#allocation3 + $0x28] sm:$0xf] %v184
  %v189 = vld [vmem:[%s151] sm:$0xff]
  %v190 = vld [vmem:[%s151 + $0x8] sm:$0xf]
  %v193 = vcombine.high %v189, %v189
  %194 = vrot.lane.b32.xlu0 %v189, 16
  %v195 = vpop.permute.xlu0 %194
  %196 = vrot.lane.b32.xlu0 %v193, 16
  %v197 = vpop.permute.xlu0 %196
  %198 = vrot.lane.b32.xlu0 %v190, 16
  %v199 = vpop.permute.xlu0 %198
  %v200 = vsel %vm182, %v195, %v197
  %v201 = vsel %vm182, %v197, %v199
  %204 = vst [vmem:[#allocation3 + $0x30] sm:$0xf] %v200
  %205 = vst [vmem:[#allocation3 + $0x38] sm:$0xf] %v201
  %v206 = vld [vmem:[#allocation2] sm:$0xff]
  %v207 = vld [vmem:[#allocation2 + $0x8] sm:$0xf]
  %v210 = vcombine.high %v206, %v206
  %211 = vrot.lane.b32.xlu0 %v206, 15
  %v212 = vpop.permute.xlu0 %211
  %213 = vrot.lane.b32.xlu0 %v210, 15
  %v214 = vpop.permute.xlu0 %213
  %215 = vrot.lane.b32.xlu0 %v207, 15
  %v216 = vpop.permute.xlu0 %215
  %vm217 = vcmask 121856
  %v218 = vsel %vm217, %v212, %v214
  %v219 = vsel %vm217, %v214, %v216
  %v222 = vsel %vm129, %v218, 0.0
  %v223 = vsel %vm130, %v219, 0.0
  %224 = vst [vmem:[#allocation3 + $0x40] sm:$0xf] %v222
  %225 = vst [vmem:[#allocation3 + $0x48] sm:$0xf] %v223
  %v226 = vld [vmem:[%s151] sm:$0xff]
  %v227 = vld [vmem:[%s151 + $0x8] sm:$0xf]
  %v230 = vcombine.high %v226, %v226
  %231 = vrot.lane.b32.xlu0 %v226, 15
  %v232 = vpop.permute.xlu0 %231
  %233 = vrot.lane.b32.xlu0 %v230, 15
  %v234 = vpop.permute.xlu0 %233
  %235 = vrot.lane.b32.xlu0 %v227, 15
  %v236 = vpop.permute.xlu0 %235
  %v237 = vsel %vm217, %v232, %v234
  %v238 = vsel %vm217, %v234, %v236
  %v241 = vsel %vm129, %v237, 0.0
  %v242 = vsel %vm130, %v238, 0.0
  %243 = vst [vmem:[#allocation3 + $0x50] sm:$0xf] %v241
  %244 = vst [vmem:[#allocation3 + $0x58] sm:$0xf] %v242
  %v245 = vld [vmem:[#allocation2] sm:$0xff]
  %v246 = vld [vmem:[#allocation2 + $0x8] sm:$0xf]
  %v249 = vcombine.high %v245, %v245
  %250 = vrot.lane.b32.xlu0 %v245, 1
  %v251 = vpop.permute.xlu0 %250
  %252 = vrot.lane.b32.xlu0 %v249, 1
  %v253 = vpop.permute.xlu0 %252
  %254 = vrot.lane.b32.xlu0 %v246, 1
  %v255 = vpop.permute.xlu0 %254
  %vm256 = vcmask 7168
  %v257 = vsel %vm256, %v251, %v253
  %v258 = vsel %vm256, %v253, %v255
  %v261 = vsel %vm123, %v257, 0.0
  %v262 = vsel %vm124, %v258, 0.0
  %263 = vst [vmem:[#allocation3 + $0x60] sm:$0xf] %v261
  %264 = vst [vmem:[#allocation3 + $0x68] sm:$0xf] %v262
  %v265 = vld [vmem:[%s151] sm:$0xff]
  %v266 = vld [vmem:[%s151 + $0x8] sm:$0xf]
  %v269 = vcombine.high %v265, %v265
  %270 = vrot.lane.b32.xlu0 %v265, 1
  %v271 = vpop.permute.xlu0 %270
  %272 = vrot.lane.b32.xlu0 %v269, 1
  %v273 = vpop.permute.xlu0 %272
  %274 = vrot.lane.b32.xlu0 %v266, 1
  %v275 = vpop.permute.xlu0 %274
  %v276 = vsel %vm256, %v271, %v273
  %v277 = vsel %vm256, %v273, %v275
  %v280 = vsel %vm123, %v276, 0.0
  %v281 = vsel %vm124, %v277, 0.0
  %282 = vst [vmem:[#allocation3 + $0x70] sm:$0xf] %v280
  %283 = vst [vmem:[#allocation3 + $0x78] sm:$0xf] %v281
  %v284 = vld [vmem:[#allocation2 + $0x4] sm:$0xff]
  %v286 = vcombine.high %v284, %v284
  %288 = vst [vmem:[#allocation3 + $0x80] sm:$0xf] %v284
  %289 = vst [vmem:[#allocation3 + $0x88] sm:$0xf] %v286
  %v290 = vld [vmem:[%s151 + $0x4] sm:$0xff]
  %v292 = vcombine.high %v290, %v290
  %294 = vst [vmem:[#allocation3 + $0x90] sm:$0xf] %v290
  %295 = vst [vmem:[#allocation3 + $0x98] sm:$0xf] %v292
  %v296 = vld [vmem:[#allocation2 + $0x4] sm:$0xff]
  %v297 = vld [vmem:[#allocation2 + $0xc] sm:$0xf]
  %v300 = vcombine.high %v296, %v296
  %301 = vrot.lane.b32.xlu0 %v296, 127
  %v302 = vpop.permute.xlu0 %301
  %303 = vrot.lane.b32.xlu0 %v300, 127
  %v304 = vpop.permute.xlu0 %303
  %305 = vrot.lane.b32.xlu0 %v297, 127
  %v306 = vpop.permute.xlu0 %305
  %vm307 = vcmask 1039360
  %v308 = vsel %vm307, %v302, %v304
  %v309 = vsel %vm307, %v304, %v306
  %v312 = vsel %vm129, %v308, 0.0
  %v313 = vsel %vm130, %v309, 0.0
  %314 = vst [vmem:[#allocation3 + $0xa0] sm:$0xf] %v312
  %315 = vst [vmem:[#allocation3 + $0xa8] sm:$0xf] %v313
  %v316 = vld [vmem:[%s151 + $0x4] sm:$0xff]
  %v317 = vld [vmem:[%s151 + $0xc] sm:$0xf]
  %v320 = vcombine.high %v316, %v316
  %321 = vrot.lane.b32.xlu0 %v316, 127
  %v322 = vpop.permute.xlu0 %321
  %323 = vrot.lane.b32.xlu0 %v320, 127
  %v324 = vpop.permute.xlu0 %323
  %325 = vrot.lane.b32.xlu0 %v317, 127
  %v326 = vpop.permute.xlu0 %325
  %v327 = vsel %vm307, %v322, %v324
  %v328 = vsel %vm307, %v324, %v326
  %v331 = vsel %vm129, %v327, 0.0
  %v332 = vsel %vm130, %v328, 0.0
  %333 = vst [vmem:[#allocation3 + $0xb0] sm:$0xf] %v331
  %334 = vst [vmem:[#allocation3 + $0xb8] sm:$0xf] %v332
  %v335 = vld [vmem:[#allocation2 + $0x4] sm:$0xff]
  %v336 = vld [vmem:[#allocation2 + $0xc] sm:$0xf]
  %v339 = vcombine.high %v335, %v335
  %340 = vrot.lane.b32.xlu0 %v335, 113
  %v341 = vpop.permute.xlu0 %340
  %342 = vrot.lane.b32.xlu0 %v339, 113
  %v343 = vpop.permute.xlu0 %342
  %344 = vrot.lane.b32.xlu0 %v336, 113
  %v345 = vpop.permute.xlu0 %344
  %vm346 = vcmask 924672
  %v347 = vsel %vm346, %v341, %v343
  %v348 = vsel %vm346, %v343, %v345
  %v351 = vsel %vm123, %v347, 0.0
  %v352 = vsel %vm124, %v348, 0.0
  %353 = vst [vmem:[#allocation3 + $0xc0] sm:$0xf] %v351
  %354 = vst [vmem:[#allocation3 + $0xc8] sm:$0xf] %v352
  %v355 = vld [vmem:[%s151 + $0x4] sm:$0xff]
  %v356 = vld [vmem:[%s151 + $0xc] sm:$0xf]
  %v359 = vcombine.high %v355, %v355
  %360 = vrot.lane.b32.xlu0 %v355, 113
  %v361 = vpop.permute.xlu0 %360
  %362 = vrot.lane.b32.xlu0 %v359, 113
  %v363 = vpop.permute.xlu0 %362
  %364 = vrot.lane.b32.xlu0 %v356, 113
  %v365 = vpop.permute.xlu0 %364
  %v366 = vsel %vm346, %v361, %v363
  %v367 = vsel %vm346, %v363, %v365
  %v370 = vsel %vm123, %v366, 0.0
  %v371 = vsel %vm124, %v367, 0.0
  %372 = vst [vmem:[#allocation3 + $0xd0] sm:$0xf] %v370
  %373 = vst [vmem:[#allocation3 + $0xd8] sm:$0xf] %v371
  %v374 = vld [vmem:[#allocation2 + $0x4] sm:$0xff]
  %v375 = vld [vmem:[#allocation2 + $0xc] sm:$0xf]
  %v378 = vcombine.high %v374, %v374
  %379 = vrot.lane.b32.xlu0 %v374, 112
  %v380 = vpop.permute.xlu0 %379
  %381 = vrot.lane.b32.xlu0 %v378, 112
  %v382 = vpop.permute.xlu0 %381
  %383 = vrot.lane.b32.xlu0 %v375, 112
  %v384 = vpop.permute.xlu0 %383
  %vm385 = vcmask 916480
  %v386 = vsel %vm385, %v380, %v382
  %v387 = vsel %vm385, %v382, %v384
  %390 = vst [vmem:[#allocation3 + $0xe0] sm:$0xf] %v386
  %391 = vst [vmem:[#allocation3 + $0xe8] sm:$0xf] %v387
  %v392 = vld [vmem:[%s151 + $0x4] sm:$0xff]
  %v393 = vld [vmem:[%s151 + $0xc] sm:$0xf]
  %v396 = vcombine.high %v392, %v392
  %397 = vrot.lane.b32.xlu0 %v392, 112
  %v398 = vpop.permute.xlu0 %397
  %399 = vrot.lane.b32.xlu0 %v396, 112
  %v400 = vpop.permute.xlu0 %399
  %401 = vrot.lane.b32.xlu0 %v393, 112
  %v402 = vpop.permute.xlu0 %401
  %v403 = vsel %vm385, %v398, %v400
  %v404 = vsel %vm385, %v400, %v402
  %407 = vst [vmem:[#allocation3 + $0xf0] sm:$0xf] %v403
  %408 = vst [vmem:[#allocation3 + $0xf8] sm:$0xf] %v404
  %v409 = vld [vmem:[#allocation2 + $0x4] sm:$0xff]
  %v410 = vld [vmem:[#allocation2 + $0xc] sm:$0xf]
  %v413 = vcombine.high %v409, %v409
  %414 = vrot.lane.b32.xlu0 %v409, 111
  %v415 = vpop.permute.xlu0 %414
  %416 = vrot.lane.b32.xlu0 %v413, 111
  %v417 = vpop.permute.xlu0 %416
  %418 = vrot.lane.b32.xlu0 %v410, 111
  %v419 = vpop.permute.xlu0 %418
  %vm420 = vcmask 908288
  %v421 = vsel %vm420, %v415, %v417
  %v422 = vsel %vm420, %v417, %v419
  %v425 = vsel %vm129, %v421, 0.0
  %v426 = vsel %vm130, %v422, 0.0
  %427 = vst [vmem:[#allocation3 + $0x100] sm:$0xf] %v425
  %428 = vst [vmem:[#allocation3 + $0x108] sm:$0xf] %v426
  %v429 = vld [vmem:[%s151 + $0x4] sm:$0xff]
  %v430 = vld [vmem:[%s151 + $0xc] sm:$0xf]
  %v433 = vcombine.high %v429, %v429
  %434 = vrot.lane.b32.xlu0 %v429, 111
  %v435 = vpop.permute.xlu0 %434
  %436 = vrot.lane.b32.xlu0 %v433, 111
  %v437 = vpop.permute.xlu0 %436
  %438 = vrot.lane.b32.xlu0 %v430, 111
  %v439 = vpop.permute.xlu0 %438
  %v440 = vsel %vm420, %v435, %v437
  %v441 = vsel %vm420, %v437, %v439
  %v444 = vsel %vm129, %v440, 0.0
  %v445 = vsel %vm130, %v441, 0.0
  %446 = vst [vmem:[#allocation3 + $0x110] sm:$0xf] %v444
  %447 = vst [vmem:[#allocation3 + $0x118] sm:$0xf] %v445
  %v448 = vld [vmem:[%s1] sm:$0xff]
  %v449 = vld [vmem:[#allocation3] sm:$0xff]
  %v450 = vld [vmem:[#allocation3 + $0x8] sm:$0xff]
  %v451 = vld [vmem:[#allocation3 + $0x10] sm:$0xff]
  %v452 = vld [vmem:[#allocation3 + $0x18] sm:$0xff]
  %v453 = vld [vmem:[#allocation3 + $0x20] sm:$0xff]
  %v454 = vld [vmem:[#allocation3 + $0x28] sm:$0xff]
  %v455 = vld [vmem:[#allocation3 + $0x30] sm:$0xff]
  %v456 = vld [vmem:[#allocation3 + $0x38] sm:$0xff]
  %v457 = vld [vmem:[#allocation3 + $0x40] sm:$0xff]
  %v458 = vld [vmem:[#allocation3 + $0x48] sm:$0xff]
  %v459 = vld [vmem:[#allocation3 + $0x50] sm:$0xff]
  %v460 = vld [vmem:[#allocation3 + $0x58] sm:$0xff]
  %v461 = vld [vmem:[#allocation3 + $0x60] sm:$0xff]
  %v462 = vld [vmem:[#allocation3 + $0x68] sm:$0xff]
  %v463 = vld [vmem:[#allocation3 + $0x70] sm:$0xff]
  %v464 = vld [vmem:[#allocation3 + $0x78] sm:$0xff]
  %v465 = vld [vmem:[#allocation3 + $0x80] sm:$0xff]
  %v466 = vld [vmem:[#allocation3 + $0x88] sm:$0xff]
  %v467 = vld [vmem:[#allocation3 + $0x90] sm:$0xff]
  %v468 = vld [vmem:[#allocation3 + $0x98] sm:$0xff]
  %v469 = vld [vmem:[#allocation3 + $0xa0] sm:$0xff]
  %v470 = vld [vmem:[#allocation3 + $0xa8] sm:$0xff]
  %v471 = vld [vmem:[#allocation3 + $0xb0] sm:$0xff]
  %v472 = vld [vmem:[#allocation3 + $0xb8] sm:$0xff]
  %v473 = vld [vmem:[#allocation3 + $0xc0] sm:$0xff]
  %v474 = vld [vmem:[#allocation3 + $0xc8] sm:$0xff]
  %v475 = vld [vmem:[#allocation3 + $0xd0] sm:$0xff]
  %v476 = vld [vmem:[#allocation3 + $0xd8] sm:$0xff]
  %v477 = vld [vmem:[#allocation3 + $0xe0] sm:$0xff]
  %v478 = vld [vmem:[#allocation3 + $0xe8] sm:$0xff]
  %v479 = vld [vmem:[#allocation3 + $0xf0] sm:$0xff]
  %v480 = vld [vmem:[#allocation3 + $0xf8] sm:$0xff]
  %v481 = vld [vmem:[#allocation3 + $0x100] sm:$0xff]
  %v482 = vld [vmem:[#allocation3 + $0x108] sm:$0xff]
  %v483 = vld [vmem:[#allocation3 + $0x110] sm:$0xff]
  %v484 = vld [vmem:[#allocation3 + $0x118] sm:$0xff]
  %vm485 = vcmask 588800
  %v487 = vsel %vm485, %v448, 0
  %489 = vmatprep.subr.mxu0 0.0
  %490 = vmatpush1.msra.mxu0 0.0
  %491 = vmatprep.subr.mxu0 0.0
  %492 = vmatpush1.msra.mxu0 0.0
  %493 = vmatprep.subr.mxu0 0.0
  %494 = vmatpush1.msra.mxu0 0.0
  %495 = vmatprep.subr.mxu0 0.0
  %496 = vmatpush1.msra.mxu0 0.0
  %497 = vmatprep.subr.mxu0 0.0
  %498 = vmatpush1.msra.mxu0 0.0
  %499 = vmatprep.subr.mxu0 0.0
  %500 = vmatpush1.msra.mxu0 0.0
  %501 = vmatprep.subr.mxu0 0.0
  %502 = vmatpush1.msra.mxu0 0.0
  %503 = vmatprep.subr.mxu0 %v482
  %504 = vmatpush1.msra.mxu0 %v481
  %505 = vmatprep.subr.mxu0 %v478
  %506 = vmatpush1.msra.mxu0 %v477
  %507 = vmatprep.subr.mxu0 %v474
  %508 = vmatpush1.msra.mxu0 %v473
  %509 = vmatprep.subr.mxu0 %v470
  %510 = vmatpush1.msra.mxu0 %v469
  %511 = vmatprep.subr.mxu0 %v466
  %512 = vmatpush1.msra.mxu0 %v465
  %513 = vmatprep.subr.mxu0 %v462
  %514 = vmatpush1.msra.mxu0 %v461
  %515 = vmatprep.subr.mxu0 %v458
  %516 = vmatpush1.msra.mxu0 %v457
  %517 = vmatprep.subr.mxu0 %v454
  %518 = vmatpush1.msra.mxu0 %v453
  %519 = vmatprep.subr.mxu0 %v450
  %520 = vmatpush1.msra.mxu0 %v449
  %521 = vmatprep.subr.mxu0 0.0
  %522 = vmatpush2.msra.mxu0 0.0
  %523 = vmatprep.subr.mxu0 0.0
  %524 = vmatpush2.msra.mxu0 0.0
  %525 = vmatprep.subr.mxu0 0.0
  %526 = vmatpush2.msra.mxu0 0.0
  %527 = vmatprep.subr.mxu0 0.0
  %528 = vmatpush2.msra.mxu0 0.0
  %529 = vmatprep.subr.mxu0 0.0
  %530 = vmatpush2.msra.mxu0 0.0
  %531 = vmatprep.subr.mxu0 0.0
  %532 = vmatpush2.msra.mxu0 0.0
  %533 = vmatprep.subr.mxu0 0.0
  %534 = vmatpush2.msra.mxu0 0.0
  %535 = vmatprep.subr.mxu0 0.0
  %536 = vmatpush2.msra.mxu0 0.0
  %537 = vmatprep.subr.mxu0 0.0
  %538 = vmatpush2.msra.mxu0 0.0
  %539 = vmatprep.subr.mxu0 0.0
  %540 = vmatpush2.msra.mxu0 0.0
  %541 = vmatprep.subr.mxu0 0.0
  %542 = vmatpush2.msra.mxu0 0.0
  %543 = vmatprep.subr.mxu0 0.0
  %544 = vmatpush2.msra.mxu0 0.0
  %545 = vmatprep.subr.mxu0 0.0
  %546 = vmatpush2.msra.mxu0 0.0
  %547 = vmatprep.subr.mxu0 0.0
  %548 = vmatpush2.msra.mxu0 0.0
  %549 = vmatprep.subr.mxu0 0.0
  %550 = vmatpush2.msra.mxu0 0.0
  %551 = vmatprep.subr.mxu0 0.0
  %552 = vmatpush2.msra.mxu0 0.0
  %553 = vmatprep.mubr.f32.mxu0 0.0
  %554 = vmatmul.mubr.f32.gmra.mxu0 %v487
  %v555 = vpop.f32.mrf.mxu0
  %v556 = vadd.f32 0.0, %v555
  %v557 = vpop.f32.mrf.mxu0
  %v558 = vadd.f32 0.0, %v557
  %559 = vdwg.mxu0
  %560 = vmatprep.subr.mxu0 0.0
  %561 = vmatpush1.msra.mxu0 0.0
  %562 = vmatprep.subr.mxu0 0.0
  %563 = vmatpush1.msra.mxu0 0.0
  %564 = vmatprep.subr.mxu0 0.0
  %565 = vmatpush1.msra.mxu0 0.0
  %566 = vmatprep.subr.mxu0 0.0
  %567 = vmatpush1.msra.mxu0 0.0
  %568 = vmatprep.subr.mxu0 0.0
  %569 = vmatpush1.msra.mxu0 0.0
  %570 = vmatprep.subr.mxu0 0.0
  %571 = vmatpush1.msra.mxu0 0.0
  %572 = vmatprep.subr.mxu0 0.0
  %573 = vmatpush1.msra.mxu0 0.0
  %574 = vmatprep.subr.mxu0 %v484
  %575 = vmatpush1.msra.mxu0 %v483
  %576 = vmatprep.subr.mxu0 %v480
  %577 = vmatpush1.msra.mxu0 %v479
  %578 = vmatprep.subr.mxu0 %v476
  %579 = vmatpush1.msra.mxu0 %v475
  %580 = vmatprep.subr.mxu0 %v472
  %581 = vmatpush1.msra.mxu0 %v471
  %582 = vmatprep.subr.mxu0 %v468
  %583 = vmatpush1.msra.mxu0 %v467
  %584 = vmatprep.subr.mxu0 %v464
  %585 = vmatpush1.msra.mxu0 %v463
  %586 = vmatprep.subr.mxu0 %v460
  %587 = vmatpush1.msra.mxu0 %v459
  %588 = vmatprep.subr.mxu0 %v456
  %589 = vmatpush1.msra.mxu0 %v455
  %590 = vmatprep.subr.mxu0 %v452
  %591 = vmatpush1.msra.mxu0 %v451
  %592 = vmatprep.subr.mxu0 0.0
  %593 = vmatpush2.msra.mxu0 0.0
  %594 = vmatprep.subr.mxu0 0.0
  %595 = vmatpush2.msra.mxu0 0.0
  %596 = vmatprep.subr.mxu0 0.0
  %597 = vmatpush2.msra.mxu0 0.0
  %598 = vmatprep.subr.mxu0 0.0
  %599 = vmatpush2.msra.mxu0 0.0
  %600 = vmatprep.subr.mxu0 0.0
  %601 = vmatpush2.msra.mxu0 0.0
  %602 = vmatprep.subr.mxu0 0.0
  %603 = vmatpush2.msra.mxu0 0.0
  %604 = vmatprep.subr.mxu0 0.0
  %605 = vmatpush2.msra.mxu0 0.0
  %606 = vmatprep.subr.mxu0 0.0
  %607 = vmatpush2.msra.mxu0 0.0
  %608 = vmatprep.subr.mxu0 0.0
  %609 = vmatpush2.msra.mxu0 0.0
  %610 = vmatprep.subr.mxu0 0.0
  %611 = vmatpush2.msra.mxu0 0.0
  %612 = vmatprep.subr.mxu0 0.0
  %613 = vmatpush2.msra.mxu0 0.0
  %614 = vmatprep.subr.mxu0 0.0
  %615 = vmatpush2.msra.mxu0 0.0
  %616 = vmatprep.subr.mxu0 0.0
  %617 = vmatpush2.msra.mxu0 0.0
  %618 = vmatprep.subr.mxu0 0.0
  %619 = vmatpush2.msra.mxu0 0.0
  %620 = vmatprep.subr.mxu0 0.0
  %621 = vmatpush2.msra.mxu0 0.0
  %622 = vmatprep.subr.mxu0 0.0
  %623 = vmatpush2.msra.mxu0 0.0
  %624 = vmatprep.mubr.f32.mxu0 0.0
  %625 = vmatmul.mubr.f32.gmra.mxu0 %v487
  %v626 = vpop.f32.mrf.mxu0
  %v627 = vadd.f32 0.0, %v626
  %v628 = vpop.f32.mrf.mxu0
  %v629 = vadd.f32 0.0, %v628
  %630 = vdwg.mxu0
  %vm631 = vcmp.ge.f32.partialorder %v556, 0.0
  %vm632 = vcmp.ge.f32.partialorder %v558, 0.0
  %vm633 = vcmp.ge.f32.partialorder %v627, 0.0
  %vm634 = vcmp.ge.f32.partialorder %v629, 0.0
  %v635 = vmul.f32 %v556, 0.2
  %v636 = vmul.f32 %v558, 0.2
  %v637 = vmul.f32 %v627, 0.2
  %v638 = vmul.f32 %v629, 0.2
  %v639 = vsel %vm631, %v556, %v635
  %v640 = vsel %vm632, %v558, %v636
  %v641 = vsel %vm633, %v627, %v637
  %v642 = vsel %vm634, %v629, %v638
  %643 = vst [vmem:[%s2] sm:$0xff] %v639
  %644 = vst [vmem:[%s2 + $0x8] sm:$0xff] %v640
  %s645 = scalar_lea.vmem %s2, 16
  %646 = vst [vmem:[%s645] sm:$0xff] %v641
  %647 = vst [vmem:[%s645 + $0x8] sm:$0xff] %v642
  // Predicated region
  $region10: #{deconv_block_forward.1} parent=0 // pred_check
    _
  $region11: #{deconv_block_forward.1} parent=0 // pred_check_branch
    %649 = sbr.rel (0) target = $region13
  $region12: #{deconv_block_forward.1} parent=0 // pred_region
    _
  $region13: #{deconv_block_forward.1} parent=0 // pred_fallthru
    _
  // Predicated region
  $region14: #{deconv_block_forward.1} parent=0 // pred_check
    _
  $region15: #{deconv_block_forward.1} parent=0 // pred_check_branch
    %651 = sbr.rel (0) target = $region17
  $region16: #{deconv_block_forward.1} parent=0 // pred_region
    _
  $region17: #{deconv_block_forward.1} parent=0 // pred_fallthru
    _

</llo_original>
